<compile_context>
chip_gen: v6e
topology: v6e:2x2x1
jax: 0.10.0
libtpu: 0.0.40
codegen_flags: <defaults>
</compile_context>

<pallas_src>
import functools

import jax
import jax.numpy as jnp
from jax import lax
from jax.experimental import pallas as pl
from jax.experimental.pallas import tpu as pltpu

_RP = 8     # sublane-aligned batch padding
_CP = 128   # lane-aligned feature padding


def _rnn_chunk_kernel(ax_ref, h0_ref, rt_ref, h_seq_ref, h_carry_ref, *, tc):
    """One grid step = `tc` RNN timesteps.

    ax_ref:      (tc, RP, CP)  padded pre-projected inputs  a_t = x_t @ A^T
    h0_ref:      (RP, CP)      padded initial hidden state  (VMEM-resident)
    rt_ref:      (CP, CP)      padded R^T                   (VMEM-resident)
    h_seq_ref:   (tc, RP, CP)  padded h_t for every timestep in this chunk
    h_carry_ref: (RP, CP)      persistent scratch carrying h across chunks
    """
    @pl.when(pl.program_id(0) == 0)
    def _():
        h_carry_ref[...] = h0_ref[...]

    rt = rt_ref[...]

    def step(i, h):
        # Serial critical path is just: dot + add + tanh.
        pre = jnp.dot(h, rt, preferred_element_type=jnp.float32) + ax_ref[i]
        h_new = jnp.tanh(pre)
        h_seq_ref[i] = h_new
        return h_new

    h_last = lax.fori_loop(0, tc, step, h_carry_ref[...], unroll=True)
    # Carry h across grid steps (stays in VMEM, never touches HBM).
    h_carry_ref[...] = h_last


def rnn_sequence(xs, h0, A, R, B, *, tc=8):
    """Pallas equivalent of running Vanilla_RNN.forward over a sequence.

    xs: (T, batch, input_size)   h0: (batch, hidden_size)
    A:  (hidden_size, input_size)
    R:  (hidden_size, hidden_size)
    B:  (output_size, hidden_size)        (PyTorch nn.Linear weight layout)
    Returns (ys, h_final) with ys: (T, batch, output_size).
    """
    T, bsz, in_sz = xs.shape
    hid = h0.shape[1]
    out_sz = B.shape[0]
    assert bsz <= _RP, "batch must be <= 8 for this tiling"
    assert max(in_sz, hid, out_sz) <= _CP, "feature dims must be <= 128"

    nc = -(-T // tc)            # number of time chunks (grid size)
    t_pad = nc * tc

    xs = xs.astype(jnp.float32)
    A = A.astype(jnp.float32)
    R = R.astype(jnp.float32)
    B = B.astype(jnp.float32)
    h0 = h0.astype(jnp.float32)

    # Hoisted input projection: one batched matmul over all timesteps
    # (no sequential dependence), fused with the padding.
    ax = jnp.einsum('tbi,hi->tbh', xs, A)                      # (T, bsz, hid)
    ax_p = jnp.zeros((t_pad, _RP, _CP), jnp.float32)
    ax_p = ax_p.at[:T, :bsz, :hid].set(ax)

    h0_p = jnp.zeros((_RP, _CP), jnp.float32).at[:bsz, :hid].set(h0)
    rt_p = jnp.zeros((_CP, _CP), jnp.float32).at[:hid, :hid].set(R.T)

    flops = 2 * t_pad * _RP * _CP * _CP                         # recurrent matmuls
    transcendentals = t_pad * _RP * _CP                         # tanh
    bytes_accessed = 4 * (2 * t_pad * _RP * _CP + _CP * _CP + _RP * _CP)

    h_seq_p = pl.pallas_call(
        functools.partial(_rnn_chunk_kernel, tc=tc),
        out_shape=jax.ShapeDtypeStruct((t_pad, _RP, _CP), jnp.float32),
        grid=(nc,),
        in_specs=[
            pl.BlockSpec((tc, _RP, _CP), lambda c: (c, 0, 0)),  # ax chunk
            pl.BlockSpec((_RP, _CP), lambda c: (0, 0)),         # h0 (resident)
            pl.BlockSpec((_CP, _CP), lambda c: (0, 0)),         # R^T (resident)
        ],
        out_specs=pl.BlockSpec((tc, _RP, _CP), lambda c: (c, 0, 0)),
        scratch_shapes=[pltpu.VMEM((_RP, _CP), jnp.float32)],   # h carry
        compiler_params=pltpu.CompilerParams(
            dimension_semantics=("arbitrary",)),                # time is sequential
        cost_estimate=pl.CostEstimate(
            flops=flops,
            transcendentals=transcendentals,
            bytes_accessed=bytes_accessed),
    )(ax_p, h0_p, rt_p)

    # Hoisted output projection over all timesteps + final-hidden slice.
    h_seq = h_seq_p[:T, :bsz, :hid]                             # (T, bsz, hid)
    ys = jnp.einsum('tbh,oh->tbo', h_seq, B)                    # (T, bsz, out)
    h_fin = h_seq[T - 1]                                        # (bsz, hid)
    return ys, h_fin


rnn_sequence_jit = jax.jit(rnn_sequence)


def _ref_sequence(xs, h0, A, R, B):
    """Pure-JAX reference matching the PyTorch forward exactly (scanned)."""
    def step(h, x):
        h_new = jnp.tanh(h @ R.T + x @ A.T)
        return h_new, h_new @ B.T
    h_fin, ys = lax.scan(step, h0, xs)
    return ys, h_fin


if __name__ == "__main__":
    # Vanilla_RNN(input_size=4, hidden_size=2, output_size=4)
    input_size, hidden_size, output_size = 4, 2, 4

    # Deterministic "nn.Linear"-style init: U(-1/sqrt(fan_in), 1/sqrt(fan_in))
    key = jax.random.PRNGKey(0)
    kA, kR, kB, kX = jax.random.split(key, 4)
    A = jax.random.uniform(kA, (hidden_size, input_size), jnp.float32,
                           -1.0 / jnp.sqrt(float(input_size)),
                           1.0 / jnp.sqrt(float(input_size)))
    R = jax.random.uniform(kR, (hidden_size, hidden_size), jnp.float32,
                           -1.0 / jnp.sqrt(float(hidden_size)),
                           1.0 / jnp.sqrt(float(hidden_size)))
    B = jax.random.uniform(kB, (output_size, hidden_size), jnp.float32,
                           -1.0 / jnp.sqrt(float(hidden_size)),
                           1.0 / jnp.sqrt(float(hidden_size)))

    # h = myRNN.init_hidden()
    h0 = jnp.zeros((1, hidden_size), jnp.float32)

    # Same one-hot sequence as the PyTorch script, stacked along time.
    xs = jnp.array(
        [[[1.0, 0.0, 0.0, 0.0]],
         [[0.0, 1.0, 0.0, 0.0]],
         [[0.0, 0.0, 1.0, 0.0]],
         [[0.0, 0.0, 1.0, 0.0]],
         [[0.0, 0.0, 0.0, 1.0]]], jnp.float32)          # (T=5, batch=1, 4)

    ys, h_fin = rnn_sequence_jit(xs, h0, A, R, B)
    ys_ref, h_ref = _ref_sequence(xs, h0, A, R, B)
    jax.block_until_ready(ys)
    jax.block_until_ready(h_fin)
    assert jnp.allclose(ys, ys_ref, atol=1e-5), "y mismatch vs reference (T=5)"
    assert jnp.allclose(h_fin, h_ref, atol=1e-5), "h mismatch vs reference (T=5)"

    # Longer random sequence: exercises multi-chunk carry (T=37 -> 5 chunks).
    T_long = 37
    xs_long = jax.random.normal(kX, (T_long, 1, input_size), jnp.float32)
    ys_l, h_l = rnn_sequence_jit(xs_long, h0, A, R, B)
    ys_lr, h_lr = _ref_sequence(xs_long, h0, A, R, B)
    jax.block_until_ready(ys_l)
    assert jnp.allclose(ys_l, ys_lr, atol=1e-5), "y mismatch vs reference (T=37)"
    assert jnp.allclose(h_l, h_lr, atol=1e-5), "h mismatch vs reference (T=37)"

    print("KERNEL_OK")
</pallas_src>

<mosaic_0001>
module attributes {stable_mosaic.version = 11 : i64} {
  func.func @_rnn_chunk_kernel(%arg0: i32, %arg1: memref<8x8x128xf32, #tpu.memory_space<vmem>>, %arg2: memref<8x128xf32, #tpu.memory_space<vmem>>, %arg3: memref<128x128xf32, #tpu.memory_space<vmem>>, %arg4: memref<8x8x128xf32, #tpu.memory_space<vmem>>, %arg5: memref<8x128xf32, #tpu.memory_space<vmem>>) attributes {dimension_semantics = [#tpu.dimension_semantics<arbitrary>], iteration_bounds = array<i64: 1>, scalar_prefetch = 0 : i64, scratch_operands = 1 : i64, tpu.core_type = #tpu.core_type<tc>, window_params = [{transform_indices = @transform_0, window_bounds = array<i64: 8, 8, 128>}, {pipeline_mode = #tpu.pipeline_mode<synchronous>, transform_indices = @transform_1, window_bounds = array<i64: 8, 128>}, {pipeline_mode = #tpu.pipeline_mode<synchronous>, transform_indices = @transform_2, window_bounds = array<i64: 128, 128>}, {transform_indices = @transform_3, window_bounds = array<i64: 8, 8, 128>}]} {
    %c0_i32 = arith.constant 0 : i32
    %0 = arith.cmpi eq, %arg0, %c0_i32 : i32
    %1 = arith.extui %0 : i1 to i32
    %c0_i32_0 = arith.constant 0 : i32
    %2 = arith.cmpi ne, %1, %c0_i32_0 : i32
    scf.if %2 {
      %c0_46 = arith.constant 0 : index
      %c0_47 = arith.constant 0 : index
      %86 = vector.load %arg2[%c0_46, %c0_47] : memref<8x128xf32, #tpu.memory_space<vmem>>, vector<8x128xf32>
      %c0_48 = arith.constant 0 : index
      %c0_49 = arith.constant 0 : index
      %87 = vector.load %arg5[%c0_48, %c0_49] : memref<8x128xf32, #tpu.memory_space<vmem>>, vector<8x128xf32>
      tpu.vector_store %arg5[%c0_48, %c0_49], %86 {strides = array<i32>} : memref<8x128xf32, #tpu.memory_space<vmem>>, vector<8x128xf32>,
    } else {
    }
    %c0 = arith.constant 0 : index
    %c0_1 = arith.constant 0 : index
    %3 = vector.load %arg3[%c0, %c0_1] : memref<128x128xf32, #tpu.memory_space<vmem>>, vector<128x128xf32>
    %c0_2 = arith.constant 0 : index
    %c0_3 = arith.constant 0 : index
    %4 = vector.load %arg5[%c0_2, %c0_3] : memref<8x128xf32, #tpu.memory_space<vmem>>, vector<8x128xf32>
    %c0_i32_4 = arith.constant 0 : i32
    %cst = arith.constant dense<0.000000e+00> : vector<8x128xf32>
    %5 = tpu.matmul %4, %3, %cst {dimension_numbers = #tpu.dot_dimension_numbers<[1], [0], [0], [1], [0, 0, 1, 1], [], []>} : vector<8x128xf32>, vector<128x128xf32>, vector<8x128xf32> -> vector<8x128xf32>
    %6 = arith.index_cast %c0_i32_4 : i32 to index
    %c0_5 = arith.constant 0 : index
    %c0_6 = arith.constant 0 : index
    %7 = vector.load %arg1[%6, %c0_5, %c0_6] : memref<8x8x128xf32, #tpu.memory_space<vmem>>, vector<1x8x128xf32>
    %8 = vector.shape_cast %7 : vector<1x8x128xf32> to vector<8x128xf32>
    %9 = arith.addf %5, %8 : vector<8x128xf32>
    %10 = math.tanh %9 : vector<8x128xf32>
    %11 = arith.index_cast %c0_i32_4 : i32 to index
    %c0_7 = arith.constant 0 : index
    %c0_8 = arith.constant 0 : index
    %12 = vector.load %arg4[%11, %c0_7, %c0_8] : memref<8x8x128xf32, #tpu.memory_space<vmem>>, vector<1x8x128xf32>
    %13 = vector.shape_cast %12 : vector<1x8x128xf32> to vector<8x128xf32>
    %14 = vector.shape_cast %10 : vector<8x128xf32> to vector<1x8x128xf32>
    tpu.vector_store %arg4[%11, %c0_7, %c0_8], %14 {strides = array<i32>} : memref<8x8x128xf32, #tpu.memory_space<vmem>>, vector<1x8x128xf32>,
    %c1_i32 = arith.constant 1 : i32
    %cst_9 = arith.constant dense<0.000000e+00> : vector<8x128xf32>
    %15 = tpu.matmul %10, %3, %cst_9 {dimension_numbers = #tpu.dot_dimension_numbers<[1], [0], [0], [1], [0, 0, 1, 1], [], []>} : vector<8x128xf32>, vector<128x128xf32>, vector<8x128xf32> -> vector<8x128xf32>
    %16 = arith.index_cast %c1_i32 : i32 to index
    %c0_10 = arith.constant 0 : index
    %c0_11 = arith.constant 0 : index
    %17 = vector.load %arg1[%16, %c0_10, %c0_11] : memref<8x8x128xf32, #tpu.memory_space<vmem>>, vector<1x8x128xf32>
    %18 = vector.shape_cast %17 : vector<1x8x128xf32> to vector<8x128xf32>
    %19 = arith.addf %15, %18 : vector<8x128xf32>
    %20 = math.tanh %19 : vector<8x128xf32>
    %21 = arith.index_cast %c1_i32 : i32 to index
    %c0_12 = arith.constant 0 : index
    %c0_13 = arith.constant 0 : index
    %22 = vector.load %arg4[%21, %c0_12, %c0_13] : memref<8x8x128xf32, #tpu.memory_space<vmem>>, vector<1x8x128xf32>
    %23 = vector.shape_cast %22 : vector<1x8x128xf32> to vector<8x128xf32>
    %24 = vector.shape_cast %20 : vector<8x128xf32> to vector<1x8x128xf32>
    tpu.vector_store %arg4[%21, %c0_12, %c0_13], %24 {strides = array<i32>} : memref<8x8x128xf32, #tpu.memory_space<vmem>>, vector<1x8x128xf32>,
    %c2_i32 = arith.constant 2 : i32
    %cst_14 = arith.constant dense<0.000000e+00> : vector<8x128xf32>
    %25 = tpu.matmul %20, %3, %cst_14 {dimension_numbers = #tpu.dot_dimension_numbers<[1], [0], [0], [1], [0, 0, 1, 1], [], []>} : vector<8x128xf32>, vector<128x128xf32>, vector<8x128xf32> -> vector<8x128xf32>
    %26 = arith.index_cast %c2_i32 : i32 to index
    %c0_15 = arith.constant 0 : index
    %c0_16 = arith.constant 0 : index
    %27 = vector.load %arg1[%26, %c0_15, %c0_16] : memref<8x8x128xf32, #tpu.memory_space<vmem>>, vector<1x8x128xf32>
    %28 = vector.shape_cast %27 : vector<1x8x128xf32> to vector<8x128xf32>
    %29 = arith.addf %25, %28 : vector<8x128xf32>
    %30 = math.tanh %29 : vector<8x128xf32>
    %31 = arith.index_cast %c2_i32 : i32 to index
    %c0_17 = arith.constant 0 : index
    %c0_18 = arith.constant 0 : index
    %32 = vector.load %arg4[%31, %c0_17, %c0_18] : memref<8x8x128xf32, #tpu.memory_space<vmem>>, vector<1x8x128xf32>
    %33 = vector.shape_cast %32 : vector<1x8x128xf32> to vector<8x128xf32>
    %34 = vector.shape_cast %30 : vector<8x128xf32> to vector<1x8x128xf32>
    tpu.vector_store %arg4[%31, %c0_17, %c0_18], %34 {strides = array<i32>} : memref<8x8x128xf32, #tpu.memory_space<vmem>>, vector<1x8x128xf32>,
    %c3_i32 = arith.constant 3 : i32
    %cst_19 = arith.constant dense<0.000000e+00> : vector<8x128xf32>
    %35 = tpu.matmul %30, %3, %cst_19 {dimension_numbers = #tpu.dot_dimension_numbers<[1], [0], [0], [1], [0, 0, 1, 1], [], []>} : vector<8x128xf32>, vector<128x128xf32>, vector<8x128xf32> -> vector<8x128xf32>
    %36 = arith.index_cast %c3_i32 : i32 to index
    %c0_20 = arith.constant 0 : index
    %c0_21 = arith.constant 0 : index
    %37 = vector.load %arg1[%36, %c0_20, %c0_21] : memref<8x8x128xf32, #tpu.memory_space<vmem>>, vector<1x8x128xf32>
    %38 = vector.shape_cast %37 : vector<1x8x128xf32> to vector<8x128xf32>
    %39 = arith.addf %35, %38 : vector<8x128xf32>
    %40 = math.tanh %39 : vector<8x128xf32>
    %41 = arith.index_cast %c3_i32 : i32 to index
    %c0_22 = arith.constant 0 : index
    %c0_23 = arith.constant 0 : index
    %42 = vector.load %arg4[%41, %c0_22, %c0_23] : memref<8x8x128xf32, #tpu.memory_space<vmem>>, vector<1x8x128xf32>
    %43 = vector.shape_cast %42 : vector<1x8x128xf32> to vector<8x128xf32>
    %44 = vector.shape_cast %40 : vector<8x128xf32> to vector<1x8x128xf32>
    tpu.vector_store %arg4[%41, %c0_22, %c0_23], %44 {strides = array<i32>} : memref<8x8x128xf32, #tpu.memory_space<vmem>>, vector<1x8x128xf32>,
    %c4_i32 = arith.constant 4 : i32
    %cst_24 = arith.constant dense<0.000000e+00> : vector<8x128xf32>
    %45 = tpu.matmul %40, %3, %cst_24 {dimension_numbers = #tpu.dot_dimension_numbers<[1], [0], [0], [1], [0, 0, 1, 1], [], []>} : vector<8x128xf32>, vector<128x128xf32>, vector<8x128xf32> -> vector<8x128xf32>
    %46 = arith.index_cast %c4_i32 : i32 to index
    %c0_25 = arith.constant 0 : index
    %c0_26 = arith.constant 0 : index
    %47 = vector.load %arg1[%46, %c0_25, %c0_26] : memref<8x8x128xf32, #tpu.memory_space<vmem>>, vector<1x8x128xf32>
    %48 = vector.shape_cast %47 : vector<1x8x128xf32> to vector<8x128xf32>
    %49 = arith.addf %45, %48 : vector<8x128xf32>
    %50 = math.tanh %49 : vector<8x128xf32>
    %51 = arith.index_cast %c4_i32 : i32 to index
    %c0_27 = arith.constant 0 : index
    %c0_28 = arith.constant 0 : index
    %52 = vector.load %arg4[%51, %c0_27, %c0_28] : memref<8x8x128xf32, #tpu.memory_space<vmem>>, vector<1x8x128xf32>
    %53 = vector.shape_cast %52 : vector<1x8x128xf32> to vector<8x128xf32>
    %54 = vector.shape_cast %50 : vector<8x128xf32> to vector<1x8x128xf32>
    tpu.vector_store %arg4[%51, %c0_27, %c0_28], %54 {strides = array<i32>} : memref<8x8x128xf32, #tpu.memory_space<vmem>>, vector<1x8x128xf32>,
    %c5_i32 = arith.constant 5 : i32
    %cst_29 = arith.constant dense<0.000000e+00> : vector<8x128xf32>
    %55 = tpu.matmul %50, %3, %cst_29 {dimension_numbers = #tpu.dot_dimension_numbers<[1], [0], [0], [1], [0, 0, 1, 1], [], []>} : vector<8x128xf32>, vector<128x128xf32>, vector<8x128xf32> -> vector<8x128xf32>
    %56 = arith.index_cast %c5_i32 : i32 to index
    %c0_30 = arith.constant 0 : index
    %c0_31 = arith.constant 0 : index
    %57 = vector.load %arg1[%56, %c0_30, %c0_31] : memref<8x8x128xf32, #tpu.memory_space<vmem>>, vector<1x8x128xf32>
    %58 = vector.shape_cast %57 : vector<1x8x128xf32> to vector<8x128xf32>
    %59 = arith.addf %55, %58 : vector<8x128xf32>
    %60 = math.tanh %59 : vector<8x128xf32>
    %61 = arith.index_cast %c5_i32 : i32 to index
    %c0_32 = arith.constant 0 : index
    %c0_33 = arith.constant 0 : index
    %62 = vector.load %arg4[%61, %c0_32, %c0_33] : memref<8x8x128xf32, #tpu.memory_space<vmem>>, vector<1x8x128xf32>
    %63 = vector.shape_cast %62 : vector<1x8x128xf32> to vector<8x128xf32>
    %64 = vector.shape_cast %60 : vector<8x128xf32> to vector<1x8x128xf32>
    tpu.vector_store %arg4[%61, %c0_32, %c0_33], %64 {strides = array<i32>} : memref<8x8x128xf32, #tpu.memory_space<vmem>>, vector<1x8x128xf32>,
    %c6_i32 = arith.constant 6 : i32
    %cst_34 = arith.constant dense<0.000000e+00> : vector<8x128xf32>
    %65 = tpu.matmul %60, %3, %cst_34 {dimension_numbers = #tpu.dot_dimension_numbers<[1], [0], [0], [1], [0, 0, 1, 1], [], []>} : vector<8x128xf32>, vector<128x128xf32>, vector<8x128xf32> -> vector<8x128xf32>
    %66 = arith.index_cast %c6_i32 : i32 to index
    %c0_35 = arith.constant 0 : index
    %c0_36 = arith.constant 0 : index
    %67 = vector.load %arg1[%66, %c0_35, %c0_36] : memref<8x8x128xf32, #tpu.memory_space<vmem>>, vector<1x8x128xf32>
    %68 = vector.shape_cast %67 : vector<1x8x128xf32> to vector<8x128xf32>
    %69 = arith.addf %65, %68 : vector<8x128xf32>
    %70 = math.tanh %69 : vector<8x128xf32>
    %71 = arith.index_cast %c6_i32 : i32 to index
    %c0_37 = arith.constant 0 : index
    %c0_38 = arith.constant 0 : index
    %72 = vector.load %arg4[%71, %c0_37, %c0_38] : memref<8x8x128xf32, #tpu.memory_space<vmem>>, vector<1x8x128xf32>
    %73 = vector.shape_cast %72 : vector<1x8x128xf32> to vector<8x128xf32>
    %74 = vector.shape_cast %70 : vector<8x128xf32> to vector<1x8x128xf32>
    tpu.vector_store %arg4[%71, %c0_37, %c0_38], %74 {strides = array<i32>} : memref<8x8x128xf32, #tpu.memory_space<vmem>>, vector<1x8x128xf32>,
    %c7_i32 = arith.constant 7 : i32
    %cst_39 = arith.constant dense<0.000000e+00> : vector<8x128xf32>
    %75 = tpu.matmul %70, %3, %cst_39 {dimension_numbers = #tpu.dot_dimension_numbers<[1], [0], [0], [1], [0, 0, 1, 1], [], []>} : vector<8x128xf32>, vector<128x128xf32>, vector<8x128xf32> -> vector<8x128xf32>
    %76 = arith.index_cast %c7_i32 : i32 to index
    %c0_40 = arith.constant 0 : index
    %c0_41 = arith.constant 0 : index
    %77 = vector.load %arg1[%76, %c0_40, %c0_41] : memref<8x8x128xf32, #tpu.memory_space<vmem>>, vector<1x8x128xf32>
    %78 = vector.shape_cast %77 : vector<1x8x128xf32> to vector<8x128xf32>
    %79 = arith.addf %75, %78 : vector<8x128xf32>
    %80 = math.tanh %79 : vector<8x128xf32>
    %81 = arith.index_cast %c7_i32 : i32 to index
    %c0_42 = arith.constant 0 : index
    %c0_43 = arith.constant 0 : index
    %82 = vector.load %arg4[%81, %c0_42, %c0_43] : memref<8x8x128xf32, #tpu.memory_space<vmem>>, vector<1x8x128xf32>
    %83 = vector.shape_cast %82 : vector<1x8x128xf32> to vector<8x128xf32>
    %84 = vector.shape_cast %80 : vector<8x128xf32> to vector<1x8x128xf32>
    tpu.vector_store %arg4[%81, %c0_42, %c0_43], %84 {strides = array<i32>} : memref<8x8x128xf32, #tpu.memory_space<vmem>>, vector<1x8x128xf32>,
    %c8_i32 = arith.constant 8 : i32
    %c0_44 = arith.constant 0 : index
    %c0_45 = arith.constant 0 : index
    %85 = vector.load %arg5[%c0_44, %c0_45] : memref<8x128xf32, #tpu.memory_space<vmem>>, vector<8x128xf32>
    tpu.vector_store %arg5[%c0_44, %c0_45], %80 {strides = array<i32>} : memref<8x128xf32, #tpu.memory_space<vmem>>, vector<8x128xf32>,
    return
  }
  func.func @transform_0(%arg0: i32) -> (i32, i32, i32) {
    %c0_i32 = arith.constant 0 : i32
    %c0_i32_0 = arith.constant 0 : i32
    %c0_i32_1 = arith.constant 0 : i32
    return %arg0, %c0_i32, %c0_i32_0 : i32, i32, i32
  }
  func.func @transform_1(%arg0: i32) -> (i32, i32) {
    %c0_i32 = arith.constant 0 : i32
    %c0_i32_0 = arith.constant 0 : i32
    %c0_i32_1 = arith.constant 0 : i32
    return %c0_i32, %c0_i32_0 : i32, i32
  }
  func.func @transform_2(%arg0: i32) -> (i32, i32) {
    %c0_i32 = arith.constant 0 : i32
    %c0_i32_0 = arith.constant 0 : i32
    %c0_i32_1 = arith.constant 0 : i32
    return %c0_i32, %c0_i32_0 : i32, i32
  }
  func.func @transform_3(%arg0: i32) -> (i32, i32, i32) {
    %c0_i32 = arith.constant 0 : i32
    %c0_i32_0 = arith.constant 0 : i32
    %c0_i32_1 = arith.constant 0 : i32
    return %arg0, %c0_i32, %c0_i32_0 : i32, i32, i32
  }
}

</mosaic_0001>

<llo_original>
// kernel: rnn_sequence.1
$region0: #{rnn_sequence.1}
  #allocation0 [shape = 'u32[]', space=smem, size = 0x4, offset = 0x4, fixed_abs, tag = 'smem constant byte address 0x4 - core index']
  #allocation1 [shape = 'u32[144,128]{1,0:T(1,128)}', space=vmem, size = 0x12000, scoped, tag = 'internal scratch']
  #allocation2 [shape = 'f32[8,128]{1,0:T(8,128)}', space=vmem, size = 0x1000, scoped, tag = 'scratch operand']
  %s0 = inlined_call_operand.vmem [shape: f32[8,8,128], index: 0, kind: input, shape index: {}]
  %s1 = inlined_call_operand.vmem [shape: f32[8,128], index: 1, kind: input, shape index: {}]
  %s2 = inlined_call_operand.vmem [shape: f32[128,128], index: 2, kind: input, shape index: {}]
  %s3 = inlined_call_operand.vmem [shape: f32[8,8,128], index: 3, kind: output, shape index: {}]
  %s4 = sld [smem:[#allocation0]]
  $region26: #{rnn_sequence.1} parent=0
    _
  %s6 = ssub.s32 1, %s4
  %s7 = scalar_select 0, %s6, %s4
  // Predicated region
  $region2: #{rnn_sequence.1} parent=0 // pred_check
    _
  $region3: #{rnn_sequence.1} parent=0 // pred_check_branch
    %9 = sbr.rel (0) target = $region5
  $region4: #{rnn_sequence.1} parent=0 // pred_region
    _
  $region5: #{rnn_sequence.1} parent=0 // pred_fallthru
    _
  // Predicated region
  $region6: #{rnn_sequence.1} parent=0 // pred_check
    _
  $region7: #{rnn_sequence.1} parent=0 // pred_check_branch
    %11 = sbr.rel (0) target = $region9
  $region8: #{rnn_sequence.1} parent=0 // pred_region
    _
  $region9: #{rnn_sequence.1} parent=0 // pred_fallthru
    _
  // Predicated region
  $region10: #{rnn_sequence.1} parent=0 // pred_check
    _
  $region11: #{rnn_sequence.1} parent=0 // pred_check_branch
    %13 = sbr.rel (0) target = $region13
  $region12: #{rnn_sequence.1} parent=0 // pred_region
    _
  $region13: #{rnn_sequence.1} parent=0 // pred_fallthru
    _
  %p14 = scmp.eq.s32.totalorder 0, 0
  // Predicated region
  $region14: #{rnn_sequence.1} parent=0 // pred_check
    %p15 = pneg %p14
  $region15: #{rnn_sequence.1} parent=0 // pred_check_branch
    %17 = sbr.rel (%p15) target = $region17
  $region16: #{rnn_sequence.1} parent=0 // pred_region
    %v18 = vld [vmem:[%s1] sm:$0xff]
    %19 = vst [vmem:[#allocation2] sm:$0xff] %v18
  $region17: #{rnn_sequence.1} parent=0 // pred_fallthru
    _
  %v20 = vld [vmem:[%s2] sm:$0xff]
  %v21 = vld [vmem:[%s2 + $0x8] sm:$0xff]
  %v22 = vld [vmem:[%s2 + $0x10] sm:$0xff]
  %v23 = vld [vmem:[%s2 + $0x18] sm:$0xff]
  %v24 = vld [vmem:[%s2 + $0x20] sm:$0xff]
  %v25 = vld [vmem:[%s2 + $0x28] sm:$0xff]
  %v26 = vld [vmem:[%s2 + $0x30] sm:$0xff]
  %v27 = vld [vmem:[%s2 + $0x38] sm:$0xff]
  %v28 = vld [vmem:[%s2 + $0x40] sm:$0xff]
  %v29 = vld [vmem:[%s2 + $0x48] sm:$0xff]
  %v30 = vld [vmem:[%s2 + $0x50] sm:$0xff]
  %v31 = vld [vmem:[%s2 + $0x58] sm:$0xff]
  %v32 = vld [vmem:[%s2 + $0x60] sm:$0xff]
  %v33 = vld [vmem:[%s2 + $0x68] sm:$0xff]
  %v34 = vld [vmem:[%s2 + $0x70] sm:$0xff]
  %v35 = vld [vmem:[%s2 + $0x78] sm:$0xff]
  %v36 = vld [vmem:[#allocation2] sm:$0xff]
  %v37 = vld [vmem:[%s0] sm:$0xff]
  %38 = vmatprep.subr.mxu0 0.0
  %39 = vmatpush1.msra.mxu0 %v35
  %40 = vmatprep.subr.mxu0 0.0
  %41 = vmatpush1.msra.mxu0 %v34
  %42 = vmatprep.subr.mxu0 0.0
  %43 = vmatpush1.msra.mxu0 %v33
  %44 = vmatprep.subr.mxu0 0.0
  %45 = vmatpush1.msra.mxu0 %v32
  %46 = vmatprep.subr.mxu0 0.0
  %47 = vmatpush1.msra.mxu0 %v31
  %48 = vmatprep.subr.mxu0 0.0
  %49 = vmatpush1.msra.mxu0 %v30
  %50 = vmatprep.subr.mxu0 0.0
  %51 = vmatpush1.msra.mxu0 %v29
  %52 = vmatprep.subr.mxu0 0.0
  %53 = vmatpush1.msra.mxu0 %v28
  %54 = vmatprep.subr.mxu0 0.0
  %55 = vmatpush1.msra.mxu0 %v27
  %56 = vmatprep.subr.mxu0 0.0
  %57 = vmatpush1.msra.mxu0 %v26
  %58 = vmatprep.subr.mxu0 0.0
  %59 = vmatpush1.msra.mxu0 %v25
  %60 = vmatprep.subr.mxu0 0.0
  %61 = vmatpush1.msra.mxu0 %v24
  %62 = vmatprep.subr.mxu0 0.0
  %63 = vmatpush1.msra.mxu0 %v23
  %64 = vmatprep.subr.mxu0 0.0
  %65 = vmatpush1.msra.mxu0 %v22
  %66 = vmatprep.subr.mxu0 0.0
  %67 = vmatpush1.msra.mxu0 %v21
  %68 = vmatprep.subr.mxu0 0.0
  %69 = vmatpush1.msra.mxu0 %v20
  %70 = vmatprep.subr.mxu0 0.0
  %71 = vmatpush2.msra.mxu0 0.0
  %72 = vmatprep.subr.mxu0 0.0
  %73 = vmatpush2.msra.mxu0 0.0
  %74 = vmatprep.subr.mxu0 0.0
  %75 = vmatpush2.msra.mxu0 0.0
  %76 = vmatprep.subr.mxu0 0.0
  %77 = vmatpush2.msra.mxu0 0.0
  %78 = vmatprep.subr.mxu0 0.0
  %79 = vmatpush2.msra.mxu0 0.0
  %80 = vmatprep.subr.mxu0 0.0
  %81 = vmatpush2.msra.mxu0 0.0
  %82 = vmatprep.subr.mxu0 0.0
  %83 = vmatpush2.msra.mxu0 0.0
  %84 = vmatprep.subr.mxu0 0.0
  %85 = vmatpush2.msra.mxu0 0.0
  %86 = vmatprep.subr.mxu0 0.0
  %87 = vmatpush2.msra.mxu0 0.0
  %88 = vmatprep.subr.mxu0 0.0
  %89 = vmatpush2.msra.mxu0 0.0
  %90 = vmatprep.subr.mxu0 0.0
  %91 = vmatpush2.msra.mxu0 0.0
  %92 = vmatprep.subr.mxu0 0.0
  %93 = vmatpush2.msra.mxu0 0.0
  %94 = vmatprep.subr.mxu0 0.0
  %95 = vmatpush2.msra.mxu0 0.0
  %96 = vmatprep.subr.mxu0 0.0
  %97 = vmatpush2.msra.mxu0 0.0
  %98 = vmatprep.subr.mxu0 0.0
  %99 = vmatpush2.msra.mxu0 0.0
  %100 = vmatprep.subr.mxu0 0.0
  %101 = vmatpush2.msra.mxu0 0.0
  %102 = vmatprep.mubr.f32.mxu0 0.0
  %103 = vmatmul.mubr.f32.gmra.mxu0 %v36
  %v104 = vpop.f32.mrf.mxu0
  %v105 = vadd.f32 %v37, %v104
  %v106 = vpop.f32.mrf.mxu0
  %107 = vdwg.mxu0
  %v108 = vtanh.pop %v105
  %109 = vst [vmem:[%s3] sm:$0xff] %v108
  %s110 = scalar_lea.vmem %s0, 8
  %v111 = vld [vmem:[%s110] sm:$0xff]
  %112 = vmatprep.subr.mxu0 0.0
  %113 = vmatpush1.msra.mxu0 %v35
  %114 = vmatprep.subr.mxu0 0.0
  %115 = vmatpush1.msra.mxu0 %v34
  %116 = vmatprep.subr.mxu0 0.0
  %117 = vmatpush1.msra.mxu0 %v33
  %118 = vmatprep.subr.mxu0 0.0
  %119 = vmatpush1.msra.mxu0 %v32
  %120 = vmatprep.subr.mxu0 0.0
  %121 = vmatpush1.msra.mxu0 %v31
  %122 = vmatprep.subr.mxu0 0.0
  %123 = vmatpush1.msra.mxu0 %v30
  %124 = vmatprep.subr.mxu0 0.0
  %125 = vmatpush1.msra.mxu0 %v29
  %126 = vmatprep.subr.mxu0 0.0
  %127 = vmatpush1.msra.mxu0 %v28
  %128 = vmatprep.subr.mxu0 0.0
  %129 = vmatpush1.msra.mxu0 %v27
  %130 = vmatprep.subr.mxu0 0.0
  %131 = vmatpush1.msra.mxu0 %v26
  %132 = vmatprep.subr.mxu0 0.0
  %133 = vmatpush1.msra.mxu0 %v25
  %134 = vmatprep.subr.mxu0 0.0
  %135 = vmatpush1.msra.mxu0 %v24
  %136 = vmatprep.subr.mxu0 0.0
  %137 = vmatpush1.msra.mxu0 %v23
  %138 = vmatprep.subr.mxu0 0.0
  %139 = vmatpush1.msra.mxu0 %v22
  %140 = vmatprep.subr.mxu0 0.0
  %141 = vmatpush1.msra.mxu0 %v21
  %142 = vmatprep.subr.mxu0 0.0
  %143 = vmatpush1.msra.mxu0 %v20
  %144 = vmatprep.subr.mxu0 0.0
  %145 = vmatpush2.msra.mxu0 0.0
  %146 = vmatprep.subr.mxu0 0.0
  %147 = vmatpush2.msra.mxu0 0.0
  %148 = vmatprep.subr.mxu0 0.0
  %149 = vmatpush2.msra.mxu0 0.0
  %150 = vmatprep.subr.mxu0 0.0
  %151 = vmatpush2.msra.mxu0 0.0
  %152 = vmatprep.subr.mxu0 0.0
  %153 = vmatpush2.msra.mxu0 0.0
  %154 = vmatprep.subr.mxu0 0.0
  %155 = vmatpush2.msra.mxu0 0.0
  %156 = vmatprep.subr.mxu0 0.0
  %157 = vmatpush2.msra.mxu0 0.0
  %158 = vmatprep.subr.mxu0 0.0
  %159 = vmatpush2.msra.mxu0 0.0
  %160 = vmatprep.subr.mxu0 0.0
  %161 = vmatpush2.msra.mxu0 0.0
  %162 = vmatprep.subr.mxu0 0.0
  %163 = vmatpush2.msra.mxu0 0.0
  %164 = vmatprep.subr.mxu0 0.0
  %165 = vmatpush2.msra.mxu0 0.0
  %166 = vmatprep.subr.mxu0 0.0
  %167 = vmatpush2.msra.mxu0 0.0
  %168 = vmatprep.subr.mxu0 0.0
  %169 = vmatpush2.msra.mxu0 0.0
  %170 = vmatprep.subr.mxu0 0.0
  %171 = vmatpush2.msra.mxu0 0.0
  %172 = vmatprep.subr.mxu0 0.0
  %173 = vmatpush2.msra.mxu0 0.0
  %174 = vmatprep.subr.mxu0 0.0
  %175 = vmatpush2.msra.mxu0 0.0
  %176 = vmatprep.mubr.f32.mxu0 0.0
  %177 = vmatmul.mubr.f32.gmra.mxu0 %v108
  %v178 = vpop.f32.mrf.mxu0
  %v179 = vadd.f32 %v111, %v178
  %v180 = vpop.f32.mrf.mxu0
  %181 = vdwg.mxu0
  %v182 = vtanh.pop %v179
  %s183 = scalar_lea.vmem %s3, 8
  %184 = vst [vmem:[%s183] sm:$0xff] %v182
  %s185 = scalar_lea.vmem %s0, 16
  %v186 = vld [vmem:[%s185] sm:$0xff]
  %187 = vmatprep.subr.mxu0 0.0
  %188 = vmatpush1.msra.mxu0 %v35
  %189 = vmatprep.subr.mxu0 0.0
  %190 = vmatpush1.msra.mxu0 %v34
  %191 = vmatprep.subr.mxu0 0.0
  %192 = vmatpush1.msra.mxu0 %v33
  %193 = vmatprep.subr.mxu0 0.0
  %194 = vmatpush1.msra.mxu0 %v32
  %195 = vmatprep.subr.mxu0 0.0
  %196 = vmatpush1.msra.mxu0 %v31
  %197 = vmatprep.subr.mxu0 0.0
  %198 = vmatpush1.msra.mxu0 %v30
  %199 = vmatprep.subr.mxu0 0.0
  %200 = vmatpush1.msra.mxu0 %v29
  %201 = vmatprep.subr.mxu0 0.0
  %202 = vmatpush1.msra.mxu0 %v28
  %203 = vmatprep.subr.mxu0 0.0
  %204 = vmatpush1.msra.mxu0 %v27
  %205 = vmatprep.subr.mxu0 0.0
  %206 = vmatpush1.msra.mxu0 %v26
  %207 = vmatprep.subr.mxu0 0.0
  %208 = vmatpush1.msra.mxu0 %v25
  %209 = vmatprep.subr.mxu0 0.0
  %210 = vmatpush1.msra.mxu0 %v24
  %211 = vmatprep.subr.mxu0 0.0
  %212 = vmatpush1.msra.mxu0 %v23
  %213 = vmatprep.subr.mxu0 0.0
  %214 = vmatpush1.msra.mxu0 %v22
  %215 = vmatprep.subr.mxu0 0.0
  %216 = vmatpush1.msra.mxu0 %v21
  %217 = vmatprep.subr.mxu0 0.0
  %218 = vmatpush1.msra.mxu0 %v20
  %219 = vmatprep.subr.mxu0 0.0
  %220 = vmatpush2.msra.mxu0 0.0
  %221 = vmatprep.subr.mxu0 0.0
  %222 = vmatpush2.msra.mxu0 0.0
  %223 = vmatprep.subr.mxu0 0.0
  %224 = vmatpush2.msra.mxu0 0.0
  %225 = vmatprep.subr.mxu0 0.0
  %226 = vmatpush2.msra.mxu0 0.0
  %227 = vmatprep.subr.mxu0 0.0
  %228 = vmatpush2.msra.mxu0 0.0
  %229 = vmatprep.subr.mxu0 0.0
  %230 = vmatpush2.msra.mxu0 0.0
  %231 = vmatprep.subr.mxu0 0.0
  %232 = vmatpush2.msra.mxu0 0.0
  %233 = vmatprep.subr.mxu0 0.0
  %234 = vmatpush2.msra.mxu0 0.0
  %235 = vmatprep.subr.mxu0 0.0
  %236 = vmatpush2.msra.mxu0 0.0
  %237 = vmatprep.subr.mxu0 0.0
  %238 = vmatpush2.msra.mxu0 0.0
  %239 = vmatprep.subr.mxu0 0.0
  %240 = vmatpush2.msra.mxu0 0.0
  %241 = vmatprep.subr.mxu0 0.0
  %242 = vmatpush2.msra.mxu0 0.0
  %243 = vmatprep.subr.mxu0 0.0
  %244 = vmatpush2.msra.mxu0 0.0
  %245 = vmatprep.subr.mxu0 0.0
  %246 = vmatpush2.msra.mxu0 0.0
  %247 = vmatprep.subr.mxu0 0.0
  %248 = vmatpush2.msra.mxu0 0.0
  %249 = vmatprep.subr.mxu0 0.0
  %250 = vmatpush2.msra.mxu0 0.0
  %251 = vmatprep.mubr.f32.mxu0 0.0
  %252 = vmatmul.mubr.f32.gmra.mxu0 %v182
  %v253 = vpop.f32.mrf.mxu0
  %v254 = vadd.f32 %v186, %v253
  %v255 = vpop.f32.mrf.mxu0
  %256 = vdwg.mxu0
  %v257 = vtanh.pop %v254
  %s258 = scalar_lea.vmem %s3, 16
  %259 = vst [vmem:[%s258] sm:$0xff] %v257
  %s260 = scalar_lea.vmem %s0, 24
  %v261 = vld [vmem:[%s260] sm:$0xff]
  %262 = vmatprep.subr.mxu0 0.0
  %263 = vmatpush1.msra.mxu0 %v35
  %264 = vmatprep.subr.mxu0 0.0
  %265 = vmatpush1.msra.mxu0 %v34
  %266 = vmatprep.subr.mxu0 0.0
  %267 = vmatpush1.msra.mxu0 %v33
  %268 = vmatprep.subr.mxu0 0.0
  %269 = vmatpush1.msra.mxu0 %v32
  %270 = vmatprep.subr.mxu0 0.0
  %271 = vmatpush1.msra.mxu0 %v31
  %272 = vmatprep.subr.mxu0 0.0
  %273 = vmatpush1.msra.mxu0 %v30
  %274 = vmatprep.subr.mxu0 0.0
  %275 = vmatpush1.msra.mxu0 %v29
  %276 = vmatprep.subr.mxu0 0.0
  %277 = vmatpush1.msra.mxu0 %v28
  %278 = vmatprep.subr.mxu0 0.0
  %279 = vmatpush1.msra.mxu0 %v27
  %280 = vmatprep.subr.mxu0 0.0
  %281 = vmatpush1.msra.mxu0 %v26
  %282 = vmatprep.subr.mxu0 0.0
  %283 = vmatpush1.msra.mxu0 %v25
  %284 = vmatprep.subr.mxu0 0.0
  %285 = vmatpush1.msra.mxu0 %v24
  %286 = vmatprep.subr.mxu0 0.0
  %287 = vmatpush1.msra.mxu0 %v23
  %288 = vmatprep.subr.mxu0 0.0
  %289 = vmatpush1.msra.mxu0 %v22
  %290 = vmatprep.subr.mxu0 0.0
  %291 = vmatpush1.msra.mxu0 %v21
  %292 = vmatprep.subr.mxu0 0.0
  %293 = vmatpush1.msra.mxu0 %v20
  %294 = vmatprep.subr.mxu0 0.0
  %295 = vmatpush2.msra.mxu0 0.0
  %296 = vmatprep.subr.mxu0 0.0
  %297 = vmatpush2.msra.mxu0 0.0
  %298 = vmatprep.subr.mxu0 0.0
  %299 = vmatpush2.msra.mxu0 0.0
  %300 = vmatprep.subr.mxu0 0.0
  %301 = vmatpush2.msra.mxu0 0.0
  %302 = vmatprep.subr.mxu0 0.0
  %303 = vmatpush2.msra.mxu0 0.0
  %304 = vmatprep.subr.mxu0 0.0
  %305 = vmatpush2.msra.mxu0 0.0
  %306 = vmatprep.subr.mxu0 0.0
  %307 = vmatpush2.msra.mxu0 0.0
  %308 = vmatprep.subr.mxu0 0.0
  %309 = vmatpush2.msra.mxu0 0.0
  %310 = vmatprep.subr.mxu0 0.0
  %311 = vmatpush2.msra.mxu0 0.0
  %312 = vmatprep.subr.mxu0 0.0
  %313 = vmatpush2.msra.mxu0 0.0
  %314 = vmatprep.subr.mxu0 0.0
  %315 = vmatpush2.msra.mxu0 0.0
  %316 = vmatprep.subr.mxu0 0.0
  %317 = vmatpush2.msra.mxu0 0.0
  %318 = vmatprep.subr.mxu0 0.0
  %319 = vmatpush2.msra.mxu0 0.0
  %320 = vmatprep.subr.mxu0 0.0
  %321 = vmatpush2.msra.mxu0 0.0
  %322 = vmatprep.subr.mxu0 0.0
  %323 = vmatpush2.msra.mxu0 0.0
  %324 = vmatprep.subr.mxu0 0.0
  %325 = vmatpush2.msra.mxu0 0.0
  %326 = vmatprep.mubr.f32.mxu0 0.0
  %327 = vmatmul.mubr.f32.gmra.mxu0 %v257
  %v328 = vpop.f32.mrf.mxu0
  %v329 = vadd.f32 %v261, %v328
  %v330 = vpop.f32.mrf.mxu0
  %331 = vdwg.mxu0
  %v332 = vtanh.pop %v329
  %s333 = scalar_lea.vmem %s3, 24
  %334 = vst [vmem:[%s333] sm:$0xff] %v332
  %s335 = scalar_lea.vmem %s0, 32
  %v336 = vld [vmem:[%s335] sm:$0xff]
  %337 = vmatprep.subr.mxu0 0.0
  %338 = vmatpush1.msra.mxu0 %v35
  %339 = vmatprep.subr.mxu0 0.0
  %340 = vmatpush1.msra.mxu0 %v34
  %341 = vmatprep.subr.mxu0 0.0
  %342 = vmatpush1.msra.mxu0 %v33
  %343 = vmatprep.subr.mxu0 0.0
  %344 = vmatpush1.msra.mxu0 %v32
  %345 = vmatprep.subr.mxu0 0.0
  %346 = vmatpush1.msra.mxu0 %v31
  %347 = vmatprep.subr.mxu0 0.0
  %348 = vmatpush1.msra.mxu0 %v30
  %349 = vmatprep.subr.mxu0 0.0
  %350 = vmatpush1.msra.mxu0 %v29
  %351 = vmatprep.subr.mxu0 0.0
  %352 = vmatpush1.msra.mxu0 %v28
  %353 = vmatprep.subr.mxu0 0.0
  %354 = vmatpush1.msra.mxu0 %v27
  %355 = vmatprep.subr.mxu0 0.0
  %356 = vmatpush1.msra.mxu0 %v26
  %357 = vmatprep.subr.mxu0 0.0
  %358 = vmatpush1.msra.mxu0 %v25
  %359 = vmatprep.subr.mxu0 0.0
  %360 = vmatpush1.msra.mxu0 %v24
  %361 = vmatprep.subr.mxu0 0.0
  %362 = vmatpush1.msra.mxu0 %v23
  %363 = vmatprep.subr.mxu0 0.0
  %364 = vmatpush1.msra.mxu0 %v22
  %365 = vmatprep.subr.mxu0 0.0
  %366 = vmatpush1.msra.mxu0 %v21
  %367 = vmatprep.subr.mxu0 0.0
  %368 = vmatpush1.msra.mxu0 %v20
  %369 = vmatprep.subr.mxu0 0.0
  %370 = vmatpush2.msra.mxu0 0.0
  %371 = vmatprep.subr.mxu0 0.0
  %372 = vmatpush2.msra.mxu0 0.0
  %373 = vmatprep.subr.mxu0 0.0
  %374 = vmatpush2.msra.mxu0 0.0
  %375 = vmatprep.subr.mxu0 0.0
  %376 = vmatpush2.msra.mxu0 0.0
  %377 = vmatprep.subr.mxu0 0.0
  %378 = vmatpush2.msra.mxu0 0.0
  %379 = vmatprep.subr.mxu0 0.0
  %380 = vmatpush2.msra.mxu0 0.0
  %381 = vmatprep.subr.mxu0 0.0
  %382 = vmatpush2.msra.mxu0 0.0
  %383 = vmatprep.subr.mxu0 0.0
  %384 = vmatpush2.msra.mxu0 0.0
  %385 = vmatprep.subr.mxu0 0.0
  %386 = vmatpush2.msra.mxu0 0.0
  %387 = vmatprep.subr.mxu0 0.0
  %388 = vmatpush2.msra.mxu0 0.0
  %389 = vmatprep.subr.mxu0 0.0
  %390 = vmatpush2.msra.mxu0 0.0
  %391 = vmatprep.subr.mxu0 0.0
  %392 = vmatpush2.msra.mxu0 0.0
  %393 = vmatprep.subr.mxu0 0.0
  %394 = vmatpush2.msra.mxu0 0.0
  %395 = vmatprep.subr.mxu0 0.0
  %396 = vmatpush2.msra.mxu0 0.0
  %397 = vmatprep.subr.mxu0 0.0
  %398 = vmatpush2.msra.mxu0 0.0
  %399 = vmatprep.subr.mxu0 0.0
  %400 = vmatpush2.msra.mxu0 0.0
  %401 = vmatprep.mubr.f32.mxu0 0.0
  %402 = vmatmul.mubr.f32.gmra.mxu0 %v332
  %v403 = vpop.f32.mrf.mxu0
  %v404 = vadd.f32 %v336, %v403
  %v405 = vpop.f32.mrf.mxu0
  %406 = vdwg.mxu0
  %v407 = vtanh.pop %v404
  %s408 = scalar_lea.vmem %s3, 32
  %409 = vst [vmem:[%s408] sm:$0xff] %v407
  %s410 = scalar_lea.vmem %s0, 40
  %v411 = vld [vmem:[%s410] sm:$0xff]
  %412 = vmatprep.subr.mxu0 0.0
  %413 = vmatpush1.msra.mxu0 %v35
  %414 = vmatprep.subr.mxu0 0.0
  %415 = vmatpush1.msra.mxu0 %v34
  %416 = vmatprep.subr.mxu0 0.0
  %417 = vmatpush1.msra.mxu0 %v33
  %418 = vmatprep.subr.mxu0 0.0
  %419 = vmatpush1.msra.mxu0 %v32
  %420 = vmatprep.subr.mxu0 0.0
  %421 = vmatpush1.msra.mxu0 %v31
  %422 = vmatprep.subr.mxu0 0.0
  %423 = vmatpush1.msra.mxu0 %v30
  %424 = vmatprep.subr.mxu0 0.0
  %425 = vmatpush1.msra.mxu0 %v29
  %426 = vmatprep.subr.mxu0 0.0
  %427 = vmatpush1.msra.mxu0 %v28
  %428 = vmatprep.subr.mxu0 0.0
  %429 = vmatpush1.msra.mxu0 %v27
  %430 = vmatprep.subr.mxu0 0.0
  %431 = vmatpush1.msra.mxu0 %v26
  %432 = vmatprep.subr.mxu0 0.0
  %433 = vmatpush1.msra.mxu0 %v25
  %434 = vmatprep.subr.mxu0 0.0
  %435 = vmatpush1.msra.mxu0 %v24
  %436 = vmatprep.subr.mxu0 0.0
  %437 = vmatpush1.msra.mxu0 %v23
  %438 = vmatprep.subr.mxu0 0.0
  %439 = vmatpush1.msra.mxu0 %v22
  %440 = vmatprep.subr.mxu0 0.0
  %441 = vmatpush1.msra.mxu0 %v21
  %442 = vmatprep.subr.mxu0 0.0
  %443 = vmatpush1.msra.mxu0 %v20
  %444 = vmatprep.subr.mxu0 0.0
  %445 = vmatpush2.msra.mxu0 0.0
  %446 = vmatprep.subr.mxu0 0.0
  %447 = vmatpush2.msra.mxu0 0.0
  %448 = vmatprep.subr.mxu0 0.0
  %449 = vmatpush2.msra.mxu0 0.0
  %450 = vmatprep.subr.mxu0 0.0
  %451 = vmatpush2.msra.mxu0 0.0
  %452 = vmatprep.subr.mxu0 0.0
  %453 = vmatpush2.msra.mxu0 0.0
  %454 = vmatprep.subr.mxu0 0.0
  %455 = vmatpush2.msra.mxu0 0.0
  %456 = vmatprep.subr.mxu0 0.0
  %457 = vmatpush2.msra.mxu0 0.0
  %458 = vmatprep.subr.mxu0 0.0
  %459 = vmatpush2.msra.mxu0 0.0
  %460 = vmatprep.subr.mxu0 0.0
  %461 = vmatpush2.msra.mxu0 0.0
  %462 = vmatprep.subr.mxu0 0.0
  %463 = vmatpush2.msra.mxu0 0.0
  %464 = vmatprep.subr.mxu0 0.0
  %465 = vmatpush2.msra.mxu0 0.0
  %466 = vmatprep.subr.mxu0 0.0
  %467 = vmatpush2.msra.mxu0 0.0
  %468 = vmatprep.subr.mxu0 0.0
  %469 = vmatpush2.msra.mxu0 0.0
  %470 = vmatprep.subr.mxu0 0.0
  %471 = vmatpush2.msra.mxu0 0.0
  %472 = vmatprep.subr.mxu0 0.0
  %473 = vmatpush2.msra.mxu0 0.0
  %474 = vmatprep.subr.mxu0 0.0
  %475 = vmatpush2.msra.mxu0 0.0
  %476 = vmatprep.mubr.f32.mxu0 0.0
  %477 = vmatmul.mubr.f32.gmra.mxu0 %v407
  %v478 = vpop.f32.mrf.mxu0
  %v479 = vadd.f32 %v411, %v478
  %v480 = vpop.f32.mrf.mxu0
  %481 = vdwg.mxu0
  %v482 = vtanh.pop %v479
  %s483 = scalar_lea.vmem %s3, 40
  %484 = vst [vmem:[%s483] sm:$0xff] %v482
  %s485 = scalar_lea.vmem %s0, 48
  %v486 = vld [vmem:[%s485] sm:$0xff]
  %487 = vmatprep.subr.mxu0 0.0
  %488 = vmatpush1.msra.mxu0 %v35
  %489 = vmatprep.subr.mxu0 0.0
  %490 = vmatpush1.msra.mxu0 %v34
  %491 = vmatprep.subr.mxu0 0.0
  %492 = vmatpush1.msra.mxu0 %v33
  %493 = vmatprep.subr.mxu0 0.0
  %494 = vmatpush1.msra.mxu0 %v32
  %495 = vmatprep.subr.mxu0 0.0
  %496 = vmatpush1.msra.mxu0 %v31
  %497 = vmatprep.subr.mxu0 0.0
  %498 = vmatpush1.msra.mxu0 %v30
  %499 = vmatprep.subr.mxu0 0.0
  %500 = vmatpush1.msra.mxu0 %v29
  %501 = vmatprep.subr.mxu0 0.0
  %502 = vmatpush1.msra.mxu0 %v28
  %503 = vmatprep.subr.mxu0 0.0
  %504 = vmatpush1.msra.mxu0 %v27
  %505 = vmatprep.subr.mxu0 0.0
  %506 = vmatpush1.msra.mxu0 %v26
  %507 = vmatprep.subr.mxu0 0.0
  %508 = vmatpush1.msra.mxu0 %v25
  %509 = vmatprep.subr.mxu0 0.0
  %510 = vmatpush1.msra.mxu0 %v24
  %511 = vmatprep.subr.mxu0 0.0
  %512 = vmatpush1.msra.mxu0 %v23
  %513 = vmatprep.subr.mxu0 0.0
  %514 = vmatpush1.msra.mxu0 %v22
  %515 = vmatprep.subr.mxu0 0.0
  %516 = vmatpush1.msra.mxu0 %v21
  %517 = vmatprep.subr.mxu0 0.0
  %518 = vmatpush1.msra.mxu0 %v20
  %519 = vmatprep.subr.mxu0 0.0
  %520 = vmatpush2.msra.mxu0 0.0
  %521 = vmatprep.subr.mxu0 0.0
  %522 = vmatpush2.msra.mxu0 0.0
  %523 = vmatprep.subr.mxu0 0.0
  %524 = vmatpush2.msra.mxu0 0.0
  %525 = vmatprep.subr.mxu0 0.0
  %526 = vmatpush2.msra.mxu0 0.0
  %527 = vmatprep.subr.mxu0 0.0
  %528 = vmatpush2.msra.mxu0 0.0
  %529 = vmatprep.subr.mxu0 0.0
  %530 = vmatpush2.msra.mxu0 0.0
  %531 = vmatprep.subr.mxu0 0.0
  %532 = vmatpush2.msra.mxu0 0.0
  %533 = vmatprep.subr.mxu0 0.0
  %534 = vmatpush2.msra.mxu0 0.0
  %535 = vmatprep.subr.mxu0 0.0
  %536 = vmatpush2.msra.mxu0 0.0
  %537 = vmatprep.subr.mxu0 0.0
  %538 = vmatpush2.msra.mxu0 0.0
  %539 = vmatprep.subr.mxu0 0.0
  %540 = vmatpush2.msra.mxu0 0.0
  %541 = vmatprep.subr.mxu0 0.0
  %542 = vmatpush2.msra.mxu0 0.0
  %543 = vmatprep.subr.mxu0 0.0
  %544 = vmatpush2.msra.mxu0 0.0
  %545 = vmatprep.subr.mxu0 0.0
  %546 = vmatpush2.msra.mxu0 0.0
  %547 = vmatprep.subr.mxu0 0.0
  %548 = vmatpush2.msra.mxu0 0.0
  %549 = vmatprep.subr.mxu0 0.0
  %550 = vmatpush2.msra.mxu0 0.0
  %551 = vmatprep.mubr.f32.mxu0 0.0
  %552 = vmatmul.mubr.f32.gmra.mxu0 %v482
  %v553 = vpop.f32.mrf.mxu0
  %v554 = vadd.f32 %v486, %v553
  %v555 = vpop.f32.mrf.mxu0
  %556 = vdwg.mxu0
  %v557 = vtanh.pop %v554
  %s558 = scalar_lea.vmem %s3, 48
  %559 = vst [vmem:[%s558] sm:$0xff] %v557
  %s560 = scalar_lea.vmem %s0, 56
  %v561 = vld [vmem:[%s560] sm:$0xff]
  %562 = vmatprep.subr.mxu0 0.0
  %563 = vmatpush1.msra.mxu0 %v35
  %564 = vmatprep.subr.mxu0 0.0
  %565 = vmatpush1.msra.mxu0 %v34
  %566 = vmatprep.subr.mxu0 0.0
  %567 = vmatpush1.msra.mxu0 %v33
  %568 = vmatprep.subr.mxu0 0.0
  %569 = vmatpush1.msra.mxu0 %v32
  %570 = vmatprep.subr.mxu0 0.0
  %571 = vmatpush1.msra.mxu0 %v31
  %572 = vmatprep.subr.mxu0 0.0
  %573 = vmatpush1.msra.mxu0 %v30
  %574 = vmatprep.subr.mxu0 0.0
  %575 = vmatpush1.msra.mxu0 %v29
  %576 = vmatprep.subr.mxu0 0.0
  %577 = vmatpush1.msra.mxu0 %v28
  %578 = vmatprep.subr.mxu0 0.0
  %579 = vmatpush1.msra.mxu0 %v27
  %580 = vmatprep.subr.mxu0 0.0
  %581 = vmatpush1.msra.mxu0 %v26
  %582 = vmatprep.subr.mxu0 0.0
  %583 = vmatpush1.msra.mxu0 %v25
  %584 = vmatprep.subr.mxu0 0.0
  %585 = vmatpush1.msra.mxu0 %v24
  %586 = vmatprep.subr.mxu0 0.0
  %587 = vmatpush1.msra.mxu0 %v23
  %588 = vmatprep.subr.mxu0 0.0
  %589 = vmatpush1.msra.mxu0 %v22
  %590 = vmatprep.subr.mxu0 0.0
  %591 = vmatpush1.msra.mxu0 %v21
  %592 = vmatprep.subr.mxu0 0.0
  %593 = vmatpush1.msra.mxu0 %v20
  %594 = vmatprep.subr.mxu0 0.0
  %595 = vmatpush2.msra.mxu0 0.0
  %596 = vmatprep.subr.mxu0 0.0
  %597 = vmatpush2.msra.mxu0 0.0
  %598 = vmatprep.subr.mxu0 0.0
  %599 = vmatpush2.msra.mxu0 0.0
  %600 = vmatprep.subr.mxu0 0.0
  %601 = vmatpush2.msra.mxu0 0.0
  %602 = vmatprep.subr.mxu0 0.0
  %603 = vmatpush2.msra.mxu0 0.0
  %604 = vmatprep.subr.mxu0 0.0
  %605 = vmatpush2.msra.mxu0 0.0
  %606 = vmatprep.subr.mxu0 0.0
  %607 = vmatpush2.msra.mxu0 0.0
  %608 = vmatprep.subr.mxu0 0.0
  %609 = vmatpush2.msra.mxu0 0.0
  %610 = vmatprep.subr.mxu0 0.0
  %611 = vmatpush2.msra.mxu0 0.0
  %612 = vmatprep.subr.mxu0 0.0
  %613 = vmatpush2.msra.mxu0 0.0
  %614 = vmatprep.subr.mxu0 0.0
  %615 = vmatpush2.msra.mxu0 0.0
  %616 = vmatprep.subr.mxu0 0.0
  %617 = vmatpush2.msra.mxu0 0.0
  %618 = vmatprep.subr.mxu0 0.0
  %619 = vmatpush2.msra.mxu0 0.0
  %620 = vmatprep.subr.mxu0 0.0
  %621 = vmatpush2.msra.mxu0 0.0
  %622 = vmatprep.subr.mxu0 0.0
  %623 = vmatpush2.msra.mxu0 0.0
  %624 = vmatprep.subr.mxu0 0.0
  %625 = vmatpush2.msra.mxu0 0.0
  %626 = vmatprep.mubr.f32.mxu0 0.0
  %627 = vmatmul.mubr.f32.gmra.mxu0 %v557
  %v628 = vpop.f32.mrf.mxu0
  %v629 = vadd.f32 %v561, %v628
  %v630 = vpop.f32.mrf.mxu0
  %631 = vdwg.mxu0
  %v632 = vtanh.pop %v629
  %s633 = scalar_lea.vmem %s3, 56
  %634 = vst [vmem:[%s633] sm:$0xff] %v632
  %635 = vst [vmem:[#allocation2] sm:$0xff] %v632
  // Predicated region
  $region18: #{rnn_sequence.1} parent=0 // pred_check
    _
  $region19: #{rnn_sequence.1} parent=0 // pred_check_branch
    %637 = sbr.rel (0) target = $region21
  $region20: #{rnn_sequence.1} parent=0 // pred_region
    _
  $region21: #{rnn_sequence.1} parent=0 // pred_fallthru
    _
  // Predicated region
  $region22: #{rnn_sequence.1} parent=0 // pred_check
    _
  $region23: #{rnn_sequence.1} parent=0 // pred_check_branch
    %639 = sbr.rel (0) target = $region25
  $region24: #{rnn_sequence.1} parent=0 // pred_region
    _
  $region25: #{rnn_sequence.1} parent=0 // pred_fallthru
    _

</llo_original>
